<compile_context>
chip_gen: v6e
topology: v6e:2x2x1
jax: 0.10.0
libtpu: 0.0.40
codegen_flags: <defaults>
</compile_context>

<pallas_src>
import functools

import jax
import jax.numpy as jnp
import numpy as np
from jax.experimental import pallas as pl
from jax.experimental.pallas import tpu as pltpu

_LANE = 128


def _round_up(x, m):
    return ((x + m - 1) // m) * m


def _vmem_budget_bytes():
    """~75% of this generation's VMEM capacity; conservative fallback."""
    try:
        info = pltpu.get_tpu_info()
        cap = getattr(info, "vmem_capacity_bytes", None)
        if cap:
            return min(int(cap) * 3 // 4, 100 * 1024 * 1024)
    except Exception:
        pass
    return 48 * 1024 * 1024  # 75% of v7x's 64 MiB per-TensorCore VMEM


def _pick_tile_k(K):
    # Prefer 256-wide K tiles (match v6e/v7x 2x256 MXU, halve per-step grid
    # overhead) but only when that still leaves >= 2 grid steps so both v7x
    # TensorCores get work; small K stays at 128 to limit padding waste.
    for tk in (256, _LANE):
        if _round_up(K, tk) // tk >= 2:
            return tk
    return _LANE


# --------------------------------------------------------------------------- #
# Kernels
# --------------------------------------------------------------------------- #
def _houghnet_kernel(x_ref, w_ref, b_ref, out_ref, *,
                     lambda_sq, batch_size, approx_recip):
    """Single-pass K-tile: the full batch is resident, statistics are global."""
    proj = jnp.dot(x_ref[...], w_ref[...],
                   preferred_element_type=jnp.float32)          # (N, TK) f32
    proj = proj - b_ref[...]                                    # bias f32

    # Fused one-pass moments (sum, sum of squares), f32 accumulation.
    p2 = proj * proj
    s1 = jnp.sum(proj, axis=0, keepdims=True)                   # (1, TK)
    s2 = jnp.sum(p2, axis=0, keepdims=True)                     # (1, TK)
    inv_n = jnp.float32(1.0 / batch_size)
    inv_nm1 = jnp.float32(1.0 / (batch_size - 1))
    var = jnp.maximum((s2 - s1 * s1 * inv_n) * inv_nm1, 0.0)    # unbiased var

    # out = p2 / (p2 + var*lambda^2). Guard exact-zero denominators (padded /
    # fully degenerate columns produce 0 instead of the reference's NaN).
    denom = p2 + var * jnp.float32(lambda_sq)
    safe = jnp.where(denom > 0.0, denom, 1.0)
    if approx_recip:
        out = p2 * pl.reciprocal(safe, approx=True)              # EUP slot
    else:
        out = p2 / safe
    out_ref[...] = out.astype(out_ref.dtype)


def _stats_kernel(x_ref, w_ref, b_ref, stats_ref, *,
                  batch_size, tile_n, needs_mask):
    """Two-pass variant, pass 1: accumulate per-cluster sum / sum-of-squares."""
    n = pl.program_id(1)

    @pl.when(n == 0)
    def _():
        stats_ref[...] = jnp.zeros_like(stats_ref)

    proj = jnp.dot(x_ref[...], w_ref[...],
                   preferred_element_type=jnp.float32)
    proj = proj - b_ref[...]
    if needs_mask:  # zero out padded batch rows so they don't bias the moments
        row = jax.lax.broadcasted_iota(jnp.int32, proj.shape, 0) + n * tile_n
        proj = jnp.where(row < batch_size, proj, 0.0)
    s1 = jnp.sum(proj, axis=0, keepdims=True)
    s2 = jnp.sum(proj * proj, axis=0, keepdims=True)
    stats_ref[...] += jnp.concatenate([s1, s2], axis=0)          # (2, TK)


def _apply_kernel(x_ref, w_ref, b_ref, v_ref, out_ref, *, approx_recip):
    """Two-pass variant, pass 2: recompute proj and apply the activation."""
    proj = jnp.dot(x_ref[...], w_ref[...],
                   preferred_element_type=jnp.float32)
    proj = proj - b_ref[...]
    p2 = proj * proj
    denom = p2 + v_ref[...]                                      # v = var*lambda^2
    safe = jnp.where(denom > 0.0, denom, 1.0)
    if approx_recip:
        out = p2 * pl.reciprocal(safe, approx=True)
    else:
        out = p2 / safe
    out_ref[...] = out.astype(out_ref.dtype)


# --------------------------------------------------------------------------- #
# pallas_call builders
# --------------------------------------------------------------------------- #
def _single_pass(x_p, w_p, b_p, *, N, TK, lambda_sq, approx_recip, out_dtype,
                 vmem_limit, single_buffer_x):
    _, Dp = x_p.shape
    _, Kp = w_p.shape
    itm = jnp.dtype(x_p.dtype).itemsize
    otm = jnp.dtype(out_dtype).itemsize

    kernel = functools.partial(_houghnet_kernel, lambda_sq=lambda_sq,
                               batch_size=N, approx_recip=approx_recip)
    # x never changes across the K grid -> single-buffer it to halve its VMEM.
    x_kwargs = dict(pipeline_mode=pl.Buffered(1)) if single_buffer_x else {}

    cost = pl.CostEstimate(
        flops=2 * N * Dp * Kp + 8 * N * Kp,
        transcendentals=N * Kp,
        bytes_accessed=N * Dp * itm + Dp * Kp * itm + Kp * 4 + N * Kp * otm)

    return pl.pallas_call(
        kernel,
        out_shape=jax.ShapeDtypeStruct((N, Kp), out_dtype),
        grid_spec=pltpu.PrefetchScalarGridSpec(
            num_scalar_prefetch=0,
            grid=(Kp // TK,),
            in_specs=[
                pl.BlockSpec((N, Dp), lambda k: (0, 0), **x_kwargs),
                pl.BlockSpec((Dp, TK), lambda k: (0, k)),     # normalized W
                pl.BlockSpec((1, TK), lambda k: (0, k)),      # bias
            ],
            out_specs=pl.BlockSpec((N, TK), lambda k: (0, k)),
        ),
        compiler_params=pltpu.CompilerParams(
            dimension_semantics=("parallel",),
            vmem_limit_bytes=vmem_limit),
        cost_estimate=cost,
    )(x_p, w_p, b_p)


def _two_pass(x_p, w_p, b_p, *, N, TK, TN, lambda_sq, approx_recip, out_dtype,
              vmem_limit):
    Np, Dp = x_p.shape
    _, Kp = w_p.shape
    Kt, Nt = Kp // TK, Np // TN
    itm = jnp.dtype(x_p.dtype).itemsize
    otm = jnp.dtype(out_dtype).itemsize

    # Pass 1: per-cluster moments, N tiles as the innermost (reduction) axis.
    stats = pl.pallas_call(
        functools.partial(_stats_kernel, batch_size=N, tile_n=TN,
                          needs_mask=(Np != N)),
        out_shape=jax.ShapeDtypeStruct((2, Kp), jnp.float32),
        grid_spec=pltpu.PrefetchScalarGridSpec(
            num_scalar_prefetch=0,
            grid=(Kt, Nt),
            in_specs=[
                pl.BlockSpec((TN, Dp), lambda k, n: (n, 0)),
                pl.BlockSpec((Dp, TK), lambda k, n: (0, k)),
                pl.BlockSpec((1, TK), lambda k, n: (0, k)),
            ],
            out_specs=pl.BlockSpec((2, TK), lambda k, n: (0, k)),
        ),
        compiler_params=pltpu.CompilerParams(
            dimension_semantics=("parallel", "arbitrary"),
            vmem_limit_bytes=vmem_limit),
        cost_estimate=pl.CostEstimate(
            flops=2 * Np * Dp * Kp + 4 * Np * Kp, transcendentals=0,
            bytes_accessed=Np * Dp * itm + Dp * Kp * itm + Kp * 4 + 2 * Kp * 4),
    )(x_p, w_p, b_p)

    # Tiny (2, Kp) epilogue in plain XLA: unbiased var * lambda^2.
    s1, s2 = stats[0:1, :], stats[1:2, :]
    var = jnp.maximum((s2 - s1 * s1 * (1.0 / N)) * (1.0 / (N - 1)), 0.0)
    v = (var * lambda_sq).astype(jnp.float32)                    # (1, Kp)

    # Pass 2: recompute proj per (N, K) tile and apply the activation.
    out = pl.pallas_call(
        functools.partial(_apply_kernel, approx_recip=approx_recip),
        out_shape=jax.ShapeDtypeStruct((Np, Kp), out_dtype),
        grid_spec=pltpu.PrefetchScalarGridSpec(
            num_scalar_prefetch=0,
            grid=(Nt, Kt),
            in_specs=[
                pl.BlockSpec((TN, Dp), lambda n, k: (n, 0)),
                pl.BlockSpec((Dp, TK), lambda n, k: (0, k)),
                pl.BlockSpec((1, TK), lambda n, k: (0, k)),
                pl.BlockSpec((1, TK), lambda n, k: (0, k)),
            ],
            out_specs=pl.BlockSpec((TN, TK), lambda n, k: (n, k)),
        ),
        compiler_params=pltpu.CompilerParams(
            dimension_semantics=("parallel", "parallel"),
            vmem_limit_bytes=vmem_limit),
        cost_estimate=pl.CostEstimate(
            flops=2 * Np * Dp * Kp + 6 * Np * Kp, transcendentals=Np * Kp,
            bytes_accessed=Np * Dp * itm + Dp * Kp * itm + 2 * Kp * 4
            + Np * Kp * otm),
    )(x_p, w_p, b_p, v)
    return out


# --------------------------------------------------------------------------- #
# Public wrapper
# --------------------------------------------------------------------------- #
def houghnet_forward(x, weight, bias, lambda_activation, *,
                     matmul_dtype=jnp.float32,
                     approx_recip=False,
                     out_dtype=jnp.float32,
                     tile_k=None,
                     tile_n=None,
                     force_two_pass=False):
    """HoughNet forward. Dispatches single-pass (batch resident per K-tile)
    or two-pass N-tiled kernels depending on the per-generation VMEM budget."""
    N, D = x.shape
    Dw, K = weight.shape
    assert Dw == D, "weight must be (num_dims, num_clusters)"
    if N < 2:
        raise ValueError("unbiased std over the batch needs N >= 2")

    lambda_sq = float(lambda_activation) ** 2
    budget = _vmem_budget_bytes()

    # Hoisted constant work (plain XLA, once per call): column-normalized W.
    w_f32 = weight.astype(jnp.float32)
    col_norm = jnp.sqrt(jnp.sum(w_f32 * w_f32, axis=0, keepdims=True))
    w_norm = w_f32 / col_norm                                    # (D, K)
    bias = jnp.reshape(bias, (1, K)).astype(jnp.float32)

    # TPU-friendly padded shapes.
    Dp = _round_up(D, 16)                   # sublane/packing aligned contraction
    TK = tile_k if tile_k is not None else _pick_tile_k(K)
    Kp = _round_up(K, TK)                   # lane-dense cluster dim

    itm = jnp.dtype(matmul_dtype).itemsize
    otm = jnp.dtype(out_dtype).itemsize

    # Single-pass VMEM estimate: x counted twice (robust even if Buffered(1)
    # is unavailable), w/bias/out double-buffered, ~3 live (N, TK) f32 temps.
    n8 = _round_up(N, 8)
    single_pass_bytes = (2 * n8 * Dp * itm + 2 * Dp * TK * itm + 2 * 8 * TK * 4
                         + 2 * n8 * TK * otm + 3 * n8 * TK * 4)
    use_two_pass = force_two_pass or single_pass_bytes > budget

    w_p = jnp.zeros((Dp, Kp), matmul_dtype).at[:D, :K].set(
        w_norm.astype(matmul_dtype))
    b_p = jnp.zeros((1, Kp), jnp.float32).at[:, :K].set(bias)

    if not use_two_pass:
        x_p = jnp.zeros((N, Dp), matmul_dtype).at[:, :D].set(
            x.astype(matmul_dtype))
        try:
            out = _single_pass(x_p, w_p, b_p, N=N, TK=TK, lambda_sq=lambda_sq,
                               approx_recip=approx_recip, out_dtype=out_dtype,
                               vmem_limit=budget, single_buffer_x=True)
        except Exception:
            # pipeline_mode=pl.Buffered(1) not supported by this build: retry
            # with the default double-buffered x BlockSpec.
            out = _single_pass(x_p, w_p, b_p, N=N, TK=TK, lambda_sq=lambda_sq,
                               approx_recip=approx_recip, out_dtype=out_dtype,
                               vmem_limit=budget, single_buffer_x=False)
        return out[:, :K]

    # Two-pass N-tiled path: batch statistics stay global while only TN rows
    # of x are VMEM-resident at a time (large batch / v7x 64 MiB path).
    TN = tile_n if tile_n is not None else min(512, _round_up(N, 8))
    TN = max(8, _round_up(TN, 8))

    def _two_pass_bytes(tn):
        return (2 * tn * Dp * itm + 2 * Dp * TK * itm + 4 * 8 * TK * 4
                + 2 * tn * TK * max(otm, 4) + 3 * tn * TK * 4)

    while TN > 8 and _two_pass_bytes(TN) > budget:
        TN = _round_up(TN // 2, 8)
    # TODO(synk): for very large D where a single (TN, Dp) x tile exceeds VMEM,
    # add an "arbitrary" D-tile grid axis with an f32 accumulator scratch.

    Np = _round_up(N, TN)
    x_p = jnp.zeros((Np, Dp), matmul_dtype).at[:N, :D].set(
        x.astype(matmul_dtype))
    out = _two_pass(x_p, w_p, b_p, N=N, TK=TK, TN=TN, lambda_sq=lambda_sq,
                    approx_recip=approx_recip, out_dtype=out_dtype,
                    vmem_limit=budget)
    return out[:N, :K]


# --------------------------------------------------------------------------- #
# Reference + parameter init (replicates HoughNet.reset_parameters / forward)
# --------------------------------------------------------------------------- #
def init_params(key, num_dims, num_clusters, initial_data_mean):
    w = jax.random.uniform(key, (num_dims, num_clusters), dtype=jnp.float32,
                           minval=0.0, maxval=1.0)
    w = w / jnp.linalg.norm(w, axis=0, keepdims=True)
    bias = initial_data_mean[None, :].astype(jnp.float32) @ w   # (1, K)
    return w, bias


def houghnet_forward_ref(x, weight, bias, lambda_activation):
    """Pure-JAX f32 reference of the PyTorch forward for validation."""
    w_n = weight / jnp.linalg.norm(weight, axis=0, keepdims=True)
    proj = x @ w_n - jnp.reshape(bias, (1, -1))
    std = jnp.std(proj, axis=0, keepdims=True, ddof=1)
    d = proj / (std * lambda_activation)
    return 1.0 - 1.0 / (1.0 + d ** 2)


if __name__ == "__main__":
    num_dims = 4
    num_clusters = 8
    batch = 16
    lambda_activation = 0.5

    key = jax.random.PRNGKey(0)
    k_x, k_w, k_x2 = jax.random.split(key, 3)

    x = jax.random.normal(k_x, (batch, num_dims), dtype=jnp.float32)
    initial_data_mean = jnp.mean(x, axis=0)
    weight, bias = init_params(k_w, num_dims, num_clusters, initial_data_mean)

    ref = houghnet_forward_ref(x, weight, bias, lambda_activation)

    # 1) Accuracy mode: f32 MXU operands, exact reciprocal, single-pass path.
    out = houghnet_forward(x, weight, bias, lambda_activation)
    jax.block_until_ready(out)
    np.testing.assert_allclose(np.asarray(out), np.asarray(ref),
                               rtol=1e-5, atol=1e-5)

    # 2) Perf mode (v6e/v7x): bf16 MXU operands, bf16 output writeback, and a
    #    single EUP approximate reciprocal per element. Dominant error is the
    #    bf16 rounding of x/W, hence the loose absolute tolerance.
    out_fast = houghnet_forward(x, weight, bias, lambda_activation,
                                matmul_dtype=jnp.bfloat16, approx_recip=True,
                                out_dtype=jnp.bfloat16)
    jax.block_until_ready(out_fast)
    np.testing.assert_allclose(np.asarray(out_fast.astype(jnp.float32)),
                               np.asarray(ref), rtol=0.0, atol=0.1)

    # 3) Two-pass N-tiled path (large-batch / v7x fallback), forced at a small
    #    ragged batch so accumulation + row masking are actually exercised.
    batch2 = 19
    x2 = jax.random.normal(k_x2, (batch2, num_dims), dtype=jnp.float32)
    ref2 = houghnet_forward_ref(x2, weight, bias, lambda_activation)
    out2 = houghnet_forward(x2, weight, bias, lambda_activation,
                            force_two_pass=True, tile_n=8)
    jax.block_until_ready(out2)
    np.testing.assert_allclose(np.asarray(out2), np.asarray(ref2),
                               rtol=1e-5, atol=1e-5)

    print("KERNEL_OK")
</pallas_src>

<mosaic_0001>
module attributes {stable_mosaic.version = 11 : i64} {
  func.func @_houghnet_kernel(%arg0: i32, %arg1: memref<16x16xf32, #tpu.memory_space<vmem>>, %arg2: memref<16x128xf32, #tpu.memory_space<vmem>>, %arg3: memref<1x128xf32, #tpu.memory_space<vmem>>, %arg4: memref<16x128xf32, #tpu.memory_space<vmem>>) attributes {dimension_semantics = [#tpu.dimension_semantics<parallel>], iteration_bounds = array<i64: 1>, scalar_prefetch = 0 : i64, scratch_operands = 0 : i64, tpu.core_type = #tpu.core_type<tc>, window_params = [{pipeline_mode = #tpu.pipeline_mode<synchronous>, transform_indices = @transform_0, window_bounds = array<i64: 16, 16>}, {transform_indices = @transform_1, window_bounds = array<i64: 16, 128>}, {transform_indices = @transform_2, window_bounds = array<i64: 1, 128>}, {transform_indices = @transform_3, window_bounds = array<i64: 16, 128>}]} {
    %c0 = arith.constant 0 : index
    %c0_0 = arith.constant 0 : index
    %0 = vector.load %arg1[%c0, %c0_0] : memref<16x16xf32, #tpu.memory_space<vmem>>, vector<16x16xf32>
    %c0_1 = arith.constant 0 : index
    %c0_2 = arith.constant 0 : index
    %1 = vector.load %arg2[%c0_1, %c0_2] : memref<16x128xf32, #tpu.memory_space<vmem>>, vector<16x128xf32>
    %cst = arith.constant dense<0.000000e+00> : vector<16x128xf32>
    %2 = tpu.matmul %0, %1, %cst {dimension_numbers = #tpu.dot_dimension_numbers<[1], [0], [0], [1], [0, 0, 1, 1], [], []>} : vector<16x16xf32>, vector<16x128xf32>, vector<16x128xf32> -> vector<16x128xf32>
    %c0_3 = arith.constant 0 : index
    %c0_4 = arith.constant 0 : index
    %3 = vector.load %arg3[%c0_3, %c0_4] : memref<1x128xf32, #tpu.memory_space<vmem>>, vector<1x128xf32>
    %4 = vector.broadcast %3 : vector<1x128xf32> to vector<16x128xf32>
    %5 = arith.subf %2, %4 : vector<16x128xf32>
    %6 = arith.mulf %5, %5 : vector<16x128xf32>
    %cst_5 = arith.constant dense<0.000000e+00> : vector<128xf32>
    %7 = vector.multi_reduction <add>, %5, %cst_5 [0] : vector<16x128xf32> to vector<128xf32>
    %8 = vector.shape_cast %7 : vector<128xf32> to vector<1x128xf32>
    %cst_6 = arith.constant dense<0.000000e+00> : vector<128xf32>
    %9 = vector.multi_reduction <add>, %6, %cst_6 [0] : vector<16x128xf32> to vector<128xf32>
    %10 = vector.shape_cast %9 : vector<128xf32> to vector<1x128xf32>
    %11 = arith.mulf %8, %8 : vector<1x128xf32>
    %cst_7 = arith.constant 6.250000e-02 : f32
    %12 = vector.broadcast %cst_7 : f32 to vector<1x128xf32>
    %13 = arith.mulf %11, %12 : vector<1x128xf32>
    %14 = arith.subf %10, %13 : vector<1x128xf32>
    %cst_8 = arith.constant 0.0666666701 : f32
    %15 = vector.broadcast %cst_8 : f32 to vector<1x128xf32>
    %16 = arith.mulf %14, %15 : vector<1x128xf32>
    %cst_9 = arith.constant 0.000000e+00 : f32
    %17 = vector.broadcast %cst_9 : f32 to vector<1x128xf32>
    %18 = arith.maximumf %16, %17 : vector<1x128xf32>
    %cst_10 = arith.constant 2.500000e-01 : f32
    %19 = vector.broadcast %cst_10 : f32 to vector<1x128xf32>
    %20 = arith.mulf %18, %19 : vector<1x128xf32>
    %21 = vector.broadcast %20 : vector<1x128xf32> to vector<16x128xf32>
    %22 = arith.addf %6, %21 : vector<16x128xf32>
    %cst_11 = arith.constant 0.000000e+00 : f32
    %23 = vector.broadcast %cst_11 : f32 to vector<16x128xf32>
    %24 = arith.cmpf ogt, %22, %23 : vector<16x128xf32>
    %cst_12 = arith.constant 1.000000e+00 : f32
    %25 = vector.broadcast %cst_12 : f32 to vector<16x128xf32>
    %26 = arith.select %24, %22, %25 : vector<16x128xi1>, vector<16x128xf32>
    %27 = arith.divf %6, %26 : vector<16x128xf32>
    %c0_13 = arith.constant 0 : index
    %c0_14 = arith.constant 0 : index
    %28 = vector.load %arg4[%c0_13, %c0_14] : memref<16x128xf32, #tpu.memory_space<vmem>>, vector<16x128xf32>
    tpu.vector_store %arg4[%c0_13, %c0_14], %27 {strides = array<i32>} : memref<16x128xf32, #tpu.memory_space<vmem>>, vector<16x128xf32>,
    return
  }
  func.func @transform_0(%arg0: i32) -> (i32, i32) {
    %c0_i32 = arith.constant 0 : i32
    %c0_i32_0 = arith.constant 0 : i32
    %c0_i32_1 = arith.constant 0 : i32
    return %c0_i32, %c0_i32_0 : i32, i32
  }
  func.func @transform_1(%arg0: i32) -> (i32, i32) {
    %c0_i32 = arith.constant 0 : i32
    %c0_i32_0 = arith.constant 0 : i32
    return %c0_i32, %arg0 : i32, i32
  }
  func.func @transform_2(%arg0: i32) -> (i32, i32) {
    %c0_i32 = arith.constant 0 : i32
    %c0_i32_0 = arith.constant 0 : i32
    return %c0_i32, %arg0 : i32, i32
  }
  func.func @transform_3(%arg0: i32) -> (i32, i32) {
    %c0_i32 = arith.constant 0 : i32
    %c0_i32_0 = arith.constant 0 : i32
    return %c0_i32, %arg0 : i32, i32
  }
}

module attributes {stable_mosaic.version = 11 : i64} {
  func.func @_houghnet_kernel(%arg0: i32, %arg1: memref<16x16xf32, #tpu.memory_space<vmem>>, %arg2: memref<16x128xf32, #tpu.memory_space<vmem>>, %arg3: memref<1x128xf32, #tpu.memory_space<vmem>>, %arg4: memref<16x128xf32, #tpu.memory_space<vmem>>) attributes {dimension_semantics = [#tpu.dimension_semantics<parallel>], iteration_bounds = array<i64: 1>, scalar_prefetch = 0 : i64, scratch_operands = 0 : i64, tpu.core_type = #tpu.core_type<tc>, window_params = [{pipeline_mode = #tpu.pipeline_mode<synchronous>, transform_indices = @transform_0, window_bounds = array<i64: 16, 16>}, {transform_indices = @transform_1, window_bounds = array<i64: 16, 128>}, {transform_indices = @transform_2, window_bounds = array<i64: 1, 128>}, {transform_indices = @transform_3, window_bounds = array<i64: 16, 128>}]} {
    %c0 = arith.constant 0 : index
    %c0_0 = arith.constant 0 : index
    %0 = vector.load %arg1[%c0, %c0_0] : memref<16x16xf32, #tpu.memory_space<vmem>>, vector<16x16xf32>
    %c0_1 = arith.constant 0 : index
    %c0_2 = arith.constant 0 : index
    %1 = vector.load %arg2[%c0_1, %c0_2] : memref<16x128xf32, #tpu.memory_space<vmem>>, vector<16x128xf32>
    %cst = arith.constant dense<0.000000e+00> : vector<16x128xf32>
    %2 = tpu.matmul %0, %1, %cst {dimension_numbers = #tpu.dot_dimension_numbers<[1], [0], [0], [1], [0, 0, 1, 1], [], []>} : vector<16x16xf32>, vector<16x128xf32>, vector<16x128xf32> -> vector<16x128xf32>
    %c0_3 = arith.constant 0 : index
    %c0_4 = arith.constant 0 : index
    %3 = vector.load %arg3[%c0_3, %c0_4] : memref<1x128xf32, #tpu.memory_space<vmem>>, vector<1x128xf32>
    %4 = vector.broadcast %3 : vector<1x128xf32> to vector<16x128xf32>
    %5 = arith.subf %2, %4 : vector<16x128xf32>
    %6 = arith.mulf %5, %5 : vector<16x128xf32>
    %cst_5 = arith.constant dense<0.000000e+00> : vector<128xf32>
    %7 = vector.multi_reduction <add>, %5, %cst_5 [0] : vector<16x128xf32> to vector<128xf32>
    %8 = vector.shape_cast %7 : vector<128xf32> to vector<1x128xf32>
    %cst_6 = arith.constant dense<0.000000e+00> : vector<128xf32>
    %9 = vector.multi_reduction <add>, %6, %cst_6 [0] : vector<16x128xf32> to vector<128xf32>
    %10 = vector.shape_cast %9 : vector<128xf32> to vector<1x128xf32>
    %11 = arith.mulf %8, %8 : vector<1x128xf32>
    %cst_7 = arith.constant 6.250000e-02 : f32
    %12 = vector.broadcast %cst_7 : f32 to vector<1x128xf32>
    %13 = arith.mulf %11, %12 : vector<1x128xf32>
    %14 = arith.subf %10, %13 : vector<1x128xf32>
    %cst_8 = arith.constant 0.0666666701 : f32
    %15 = vector.broadcast %cst_8 : f32 to vector<1x128xf32>
    %16 = arith.mulf %14, %15 : vector<1x128xf32>
    %cst_9 = arith.constant 0.000000e+00 : f32
    %17 = vector.broadcast %cst_9 : f32 to vector<1x128xf32>
    %18 = arith.maximumf %16, %17 : vector<1x128xf32>
    %cst_10 = arith.constant 2.500000e-01 : f32
    %19 = vector.broadcast %cst_10 : f32 to vector<1x128xf32>
    %20 = arith.mulf %18, %19 : vector<1x128xf32>
    %21 = vector.broadcast %20 : vector<1x128xf32> to vector<16x128xf32>
    %22 = arith.addf %6, %21 : vector<16x128xf32>
    %cst_11 = arith.constant 0.000000e+00 : f32
    %23 = vector.broadcast %cst_11 : f32 to vector<16x128xf32>
    %24 = arith.cmpf ogt, %22, %23 : vector<16x128xf32>
    %cst_12 = arith.constant 1.000000e+00 : f32
    %25 = vector.broadcast %cst_12 : f32 to vector<16x128xf32>
    %26 = arith.select %24, %22, %25 : vector<16x128xi1>, vector<16x128xf32>
    %27 = arith.divf %6, %26 : vector<16x128xf32>
    %c0_13 = arith.constant 0 : index
    %c0_14 = arith.constant 0 : index
    %28 = vector.load %arg4[%c0_13, %c0_14] : memref<16x128xf32, #tpu.memory_space<vmem>>, vector<16x128xf32>
    tpu.vector_store %arg4[%c0_13, %c0_14], %27 {strides = array<i32>} : memref<16x128xf32, #tpu.memory_space<vmem>>, vector<16x128xf32>,
    return
  }
  func.func @transform_0(%arg0: i32) -> (i32, i32) {
    %c0_i32 = arith.constant 0 : i32
    %c0_i32_0 = arith.constant 0 : i32
    %c0_i32_1 = arith.constant 0 : i32
    return %c0_i32, %c0_i32_0 : i32, i32
  }
  func.func @transform_1(%arg0: i32) -> (i32, i32) {
    %c0_i32 = arith.constant 0 : i32
    %c0_i32_0 = arith.constant 0 : i32
    return %c0_i32, %arg0 : i32, i32
  }
  func.func @transform_2(%arg0: i32) -> (i32, i32) {
    %c0_i32 = arith.constant 0 : i32
    %c0_i32_0 = arith.constant 0 : i32
    return %c0_i32, %arg0 : i32, i32
  }
  func.func @transform_3(%arg0: i32) -> (i32, i32) {
    %c0_i32 = arith.constant 0 : i32
    %c0_i32_0 = arith.constant 0 : i32
    return %c0_i32, %arg0 : i32, i32
  }
}

</mosaic_0001>

<llo_original>
// kernel: tpu_custom_call.1
$region0: #{tpu_custom_call.1}
  #allocation0 [shape = 'u32[]', space=smem, size = 0x4, offset = 0x4, fixed_abs, tag = 'smem constant byte address 0x4 - core index']
  #allocation1 [shape = 'u32[144,128]{1,0:T(1,128)}', space=vmem, size = 0x12000, scoped, tag = 'internal scratch']
  %s0 = inlined_call_operand.hbm [shape: f32[16,16], index: 0, kind: input, shape index: {}]
  %s1 = inlined_call_operand.hbm [shape: f32[16,128], index: 1, kind: input, shape index: {}]
  %s2 = inlined_call_operand.vmem [shape: f32[1,128], index: 2, kind: input, shape index: {}]
  %s3 = inlined_call_operand.hbm [shape: f32[16,128], index: 3, kind: output, shape index: {}]
  %s4 = sld [smem:[#allocation0]]
  $region30: #{tpu_custom_call.1} parent=0
    _
  %s6 = ssub.s32 1, %s4
  %s7 = scalar_select 0, %s6, %s4
  $region1: #{tpu_custom_call.1} parent=0
    #allocation2 [shape = 'u8[8192]{0}', space=vmem, size = 0x2000, scoped, tag = 'input window, operand 0, single buffered']
    #allocation3 [shape = 's32[1]{0}', space=sflag, size = 0x4, scoped, tag = 'scoped memory for tpu_custom_call.1']
    #allocation4 [shape = 's32[1]{0}', space=sflag, size = 0x4, scoped, tag = 'scoped memory for tpu_custom_call.1']
    #allocation5 [shape = 'u8[8192]{0}', space=vmem, size = 0x2000, scoped, tag = 'input window, operand 1, single buffered']
    #allocation6 [shape = 's32[1]{0}', space=sflag, size = 0x4, scoped, tag = 'scoped memory for tpu_custom_call.1']
    #allocation7 [shape = 'u8[8192]{0}', space=vmem, size = 0x2000, scoped, tag = 'output window, operand 0, single buffered']
    %8 = vsyncpa [#allocation3], 0
    %9 = vsyncpa [#allocation6], 0
    %10 = vsyncpa [#allocation4], 0
    // Predicated region
    $region2: #{tpu_custom_call.1} parent=1 // pred_check
      _
    $region3: #{tpu_custom_call.1} parent=1 // pred_check_branch
      %12 = sbr.rel (0) target = $region5
    $region4: #{tpu_custom_call.1} parent=1 // pred_region
      %s14 = ssub.s32 256, 256
      %15 = vsyncadd [#allocation3], %s14
      %s16 = sshll.u32 [#allocation2], 4
      %s17 = int_to_ptr.vmem [resolvable:$true] %s16
      %22 = dma.hbm_to_vmem [thread:$0]  %s0, 256, %s17, [#allocation3], 128, 128, 8
    $region5: #{tpu_custom_call.1} parent=1 // pred_fallthru
      _
    // Predicated region
    $region6: #{tpu_custom_call.1} parent=1 // pred_check
      _
    $region7: #{tpu_custom_call.1} parent=1 // pred_check_branch
      %24 = sbr.rel (0) target = $region9
    $region8: #{tpu_custom_call.1} parent=1 // pred_region
      %s26 = ssub.s32 256, 256
      %27 = vsyncadd [#allocation6], %s26
      %s28 = sshll.u32 [#allocation5], 4
      %s29 = int_to_ptr.vmem [resolvable:$true] %s28
      %34 = dma.hbm_to_vmem [thread:$0]  %s1, 256, %s29, [#allocation6], 128, 128, 8
    $region9: #{tpu_custom_call.1} parent=1 // pred_fallthru
      _
    // Predicated region
    $region10: #{tpu_custom_call.1} parent=1 // pred_check
      _
    $region11: #{tpu_custom_call.1} parent=1 // pred_check_branch
      %36 = sbr.rel (0) target = $region13
    $region12: #{tpu_custom_call.1} parent=1 // pred_region
      _
    $region13: #{tpu_custom_call.1} parent=1 // pred_fallthru
      _
    // Predicated region
    $region14: #{tpu_custom_call.1} parent=1 // pred_check
      _
    $region15: #{tpu_custom_call.1} parent=1 // pred_check_branch
      %38 = sbr.rel (0) target = $region17
    $region16: #{tpu_custom_call.1} parent=1 // pred_region
      %39 = dma.done [#allocation3], 256
    $region17: #{tpu_custom_call.1} parent=1 // pred_fallthru
      _
    // Predicated region
    $region18: #{tpu_custom_call.1} parent=1 // pred_check
      _
    $region19: #{tpu_custom_call.1} parent=1 // pred_check_branch
      %41 = sbr.rel (0) target = $region21
    $region20: #{tpu_custom_call.1} parent=1 // pred_region
      %42 = dma.done [#allocation6], 256
    $region21: #{tpu_custom_call.1} parent=1 // pred_fallthru
      _
    %v43 = vld [vmem:[#allocation2] sm:$0xff]
    %v44 = vld [vmem:[#allocation2 + $0x8] sm:$0xff]
    %v45 = vld [vmem:[#allocation5] sm:$0xff]
    %v46 = vld [vmem:[#allocation5 + $0x8] sm:$0xff]
    %vm47 = vcmask 130048
    %v49 = vsel %vm47, %v43, 0
    %v52 = vsel %vm47, %v44, 0
    %54 = vmatprep.subr.mxu0 0.0
    %55 = vmatpush1.msra.mxu0 0.0
    %56 = vmatprep.subr.mxu0 0.0
    %57 = vmatpush1.msra.mxu0 0.0
    %58 = vmatprep.subr.mxu0 0.0
    %59 = vmatpush1.msra.mxu0 0.0
    %60 = vmatprep.subr.mxu0 0.0
    %61 = vmatpush1.msra.mxu0 0.0
    %62 = vmatprep.subr.mxu0 0.0
    %63 = vmatpush1.msra.mxu0 0.0
    %64 = vmatprep.subr.mxu0 0.0
    %65 = vmatpush1.msra.mxu0 0.0
    %66 = vmatprep.subr.mxu0 0.0
    %67 = vmatpush1.msra.mxu0 0.0
    %68 = vmatprep.subr.mxu0 0.0
    %69 = vmatpush1.msra.mxu0 0.0
    %70 = vmatprep.subr.mxu0 0.0
    %71 = vmatpush1.msra.mxu0 0.0
    %72 = vmatprep.subr.mxu0 0.0
    %73 = vmatpush1.msra.mxu0 0.0
    %74 = vmatprep.subr.mxu0 0.0
    %75 = vmatpush1.msra.mxu0 0.0
    %76 = vmatprep.subr.mxu0 0.0
    %77 = vmatpush1.msra.mxu0 0.0
    %78 = vmatprep.subr.mxu0 0.0
    %79 = vmatpush1.msra.mxu0 0.0
    %80 = vmatprep.subr.mxu0 0.0
    %81 = vmatpush1.msra.mxu0 0.0
    %82 = vmatprep.subr.mxu0 0.0
    %83 = vmatpush1.msra.mxu0 %v46
    %84 = vmatprep.subr.mxu0 0.0
    %85 = vmatpush1.msra.mxu0 %v45
    %86 = vmatprep.subr.mxu0 0.0
    %87 = vmatpush2.msra.mxu0 0.0
    %88 = vmatprep.subr.mxu0 0.0
    %89 = vmatpush2.msra.mxu0 0.0
    %90 = vmatprep.subr.mxu0 0.0
    %91 = vmatpush2.msra.mxu0 0.0
    %92 = vmatprep.subr.mxu0 0.0
    %93 = vmatpush2.msra.mxu0 0.0
    %94 = vmatprep.subr.mxu0 0.0
    %95 = vmatpush2.msra.mxu0 0.0
    %96 = vmatprep.subr.mxu0 0.0
    %97 = vmatpush2.msra.mxu0 0.0
    %98 = vmatprep.subr.mxu0 0.0
    %99 = vmatpush2.msra.mxu0 0.0
    %100 = vmatprep.subr.mxu0 0.0
    %101 = vmatpush2.msra.mxu0 0.0
    %102 = vmatprep.subr.mxu0 0.0
    %103 = vmatpush2.msra.mxu0 0.0
    %104 = vmatprep.subr.mxu0 0.0
    %105 = vmatpush2.msra.mxu0 0.0
    %106 = vmatprep.subr.mxu0 0.0
    %107 = vmatpush2.msra.mxu0 0.0
    %108 = vmatprep.subr.mxu0 0.0
    %109 = vmatpush2.msra.mxu0 0.0
    %110 = vmatprep.subr.mxu0 0.0
    %111 = vmatpush2.msra.mxu0 0.0
    %112 = vmatprep.subr.mxu0 0.0
    %113 = vmatpush2.msra.mxu0 0.0
    %114 = vmatprep.subr.mxu0 0.0
    %115 = vmatpush2.msra.mxu0 0.0
    %116 = vmatprep.subr.mxu0 0.0
    %117 = vmatpush2.msra.mxu0 0.0
    %118 = vmatprep.mubr.f32.mxu0 0.0
    %119 = vmatmul.mubr.f32.gmra.mxu0 %v49
    %v120 = vpop.f32.mrf.mxu0
    %v121 = vadd.f32 0.0, %v120
    %v122 = vpop.f32.mrf.mxu0
    %123 = vmatprep.mubr.f32.mxu0 0.0
    %124 = vmatmul.mubr.f32.gmra.mxu0 %v52
    %v125 = vpop.f32.mrf.mxu0
    %v126 = vadd.f32 0.0, %v125
    %v127 = vpop.f32.mrf.mxu0
    %128 = vdwg.mxu0
    %v129 = vld [vmem:[%s2] sm:$0x1]
    %v131 = vlaneseq
    %v132 = vshrl.u32 %v131, 7
    %v133 = vsub.s32 0, %v132
    %v134 = vrot.slane %v129, %v133
    %v136 = vsub.f32 %v121, %v134
    %v137 = vsub.f32 %v126, %v134
    %v138 = vmul.f32 %v136, %v136
    %v139 = vmul.f32 %v137, %v137
    %v140 = vadd.f32 %v136, %v137
    %v141 = vrot.slane %v140, 4
    %v142 = vadd.f32 %v140, %v141
    %v143 = vrot.slane %v142, 2
    %v144 = vadd.f32 %v142, %v143
    %v145 = vrot.slane %v144, 1
    %v146 = vadd.f32 %v144, %v145
    %v147 = vadd.f32 %v138, %v139
    %v148 = vrot.slane %v147, 4
    %v149 = vadd.f32 %v147, %v148
    %v150 = vrot.slane %v149, 2
    %v151 = vadd.f32 %v149, %v150
    %v152 = vrot.slane %v151, 1
    %v153 = vadd.f32 %v151, %v152
    %v154 = vmul.f32 %v146, %v146
    %v155 = vmul.f32 %v154, 0.0625
    %v156 = vsub.f32 %v153, %v155
    %v157 = vmul.f32 %v156, 0.06666667
    %v158 = vmax.f32 %v157, 0.0
    %v159 = vmul.f32 %v158, 0.25
    %v160 = vadd.f32 %v138, %v159
    %v161 = vadd.f32 %v139, %v159
    %vm162 = vcmp.gt.f32.partialorder %v160, 0.0
    %vm163 = vcmp.gt.f32.partialorder %v161, 0.0
    %v164 = vsel %vm162, %v160, 1.0
    %v165 = vsel %vm163, %v161, 1.0
    %v166 = vrcp.pop %v164
    %v167 = vmul.f32 %v138, %v166
    %v168 = vrcp.pop %v165
    %v169 = vmul.f32 %v139, %v168
    %170 = vst [vmem:[#allocation7] sm:$0xff] %v167
    %171 = vst [vmem:[#allocation7 + $0x8] sm:$0xff] %v169
    // Predicated region
    $region22: #{tpu_custom_call.1} parent=1 // pred_check
      _
    $region23: #{tpu_custom_call.1} parent=1 // pred_check_branch
      %173 = sbr.rel (0) target = $region25
    $region24: #{tpu_custom_call.1} parent=1 // pred_region
      %s175 = ssub.s32 256, 256
      %176 = vsyncadd [#allocation4], %s175
      %s177 = sshll.u32 [#allocation7], 4
      %s178 = int_to_ptr.vmem [resolvable:$true] %s177
      %183 = dma.vmem_to_hbm [thread:$0]  %s178, 256, %s3, [#allocation4], 128, 128, 8
    $region25: #{tpu_custom_call.1} parent=1 // pred_fallthru
      _
    // Predicated region
    $region26: #{tpu_custom_call.1} parent=1 // pred_check
      _
    $region27: #{tpu_custom_call.1} parent=1 // pred_check_branch
      %185 = sbr.rel (0) target = $region29
    $region28: #{tpu_custom_call.1} parent=1 // pred_region
      %186 = dma.done [#allocation4], 256
    $region29: #{tpu_custom_call.1} parent=1 // pred_fallthru
      _
    %187 = vsyncpa [#allocation3], 1
    %188 = vsyncpa [#allocation6], 1
    %189 = vsyncpa [#allocation4], 1

// kernel: tpu_custom_call.1
$region0: #{tpu_custom_call.1}
  #allocation0 [shape = 'u32[]', space=smem, size = 0x4, offset = 0x4, fixed_abs, tag = 'smem constant byte address 0x4 - core index']
  #allocation1 [shape = 'u32[144,128]{1,0:T(1,128)}', space=vmem, size = 0x12000, scoped, tag = 'internal scratch']
  %s0 = inlined_call_operand.hbm [shape: f32[16,16], index: 0, kind: input, shape index: {}]
  %s1 = inlined_call_operand.hbm [shape: f32[16,128], index: 1, kind: input, shape index: {}]
  %s2 = inlined_call_operand.vmem [shape: f32[1,128], index: 2, kind: input, shape index: {}]
  %s3 = inlined_call_operand.hbm [shape: f32[16,128], index: 3, kind: output, shape index: {}]
  %s4 = sld [smem:[#allocation0]]
  $region30: #{tpu_custom_call.1} parent=0
    _
  %s6 = ssub.s32 1, %s4
  %s7 = scalar_select 0, %s6, %s4
  $region1: #{tpu_custom_call.1} parent=0
    #allocation2 [shape = 'u8[8192]{0}', space=vmem, size = 0x2000, scoped, tag = 'input window, operand 0, single buffered']
    #allocation3 [shape = 's32[1]{0}', space=sflag, size = 0x4, scoped, tag = 'scoped memory for tpu_custom_call.1']
    #allocation4 [shape = 's32[1]{0}', space=sflag, size = 0x4, scoped, tag = 'scoped memory for tpu_custom_call.1']
    #allocation5 [shape = 'u8[8192]{0}', space=vmem, size = 0x2000, scoped, tag = 'input window, operand 1, single buffered']
    #allocation6 [shape = 's32[1]{0}', space=sflag, size = 0x4, scoped, tag = 'scoped memory for tpu_custom_call.1']
    #allocation7 [shape = 'u8[8192]{0}', space=vmem, size = 0x2000, scoped, tag = 'output window, operand 0, single buffered']
    %8 = vsyncpa [#allocation3], 0
    %9 = vsyncpa [#allocation6], 0
    %10 = vsyncpa [#allocation4], 0
    // Predicated region
    $region2: #{tpu_custom_call.1} parent=1 // pred_check
      _
    $region3: #{tpu_custom_call.1} parent=1 // pred_check_branch
      %12 = sbr.rel (0) target = $region5
    $region4: #{tpu_custom_call.1} parent=1 // pred_region
      %s14 = ssub.s32 256, 256
      %15 = vsyncadd [#allocation3], %s14
      %s16 = sshll.u32 [#allocation2], 4
      %s17 = int_to_ptr.vmem [resolvable:$true] %s16
      %22 = dma.hbm_to_vmem [thread:$0]  %s0, 256, %s17, [#allocation3], 128, 128, 8
    $region5: #{tpu_custom_call.1} parent=1 // pred_fallthru
      _
    // Predicated region
    $region6: #{tpu_custom_call.1} parent=1 // pred_check
      _
    $region7: #{tpu_custom_call.1} parent=1 // pred_check_branch
      %24 = sbr.rel (0) target = $region9
    $region8: #{tpu_custom_call.1} parent=1 // pred_region
      %s26 = ssub.s32 256, 256
      %27 = vsyncadd [#allocation6], %s26
      %s28 = sshll.u32 [#allocation5], 4
      %s29 = int_to_ptr.vmem [resolvable:$true] %s28
      %34 = dma.hbm_to_vmem [thread:$0]  %s1, 256, %s29, [#allocation6], 128, 128, 8
    $region9: #{tpu_custom_call.1} parent=1 // pred_fallthru
      _
    // Predicated region
    $region10: #{tpu_custom_call.1} parent=1 // pred_check
      _
    $region11: #{tpu_custom_call.1} parent=1 // pred_check_branch
      %36 = sbr.rel (0) target = $region13
    $region12: #{tpu_custom_call.1} parent=1 // pred_region
      _
    $region13: #{tpu_custom_call.1} parent=1 // pred_fallthru
      _
    // Predicated region
    $region14: #{tpu_custom_call.1} parent=1 // pred_check
      _
    $region15: #{tpu_custom_call.1} parent=1 // pred_check_branch
      %38 = sbr.rel (0) target = $region17
    $region16: #{tpu_custom_call.1} parent=1 // pred_region
      %39 = dma.done [#allocation3], 256
    $region17: #{tpu_custom_call.1} parent=1 // pred_fallthru
      _
    // Predicated region
    $region18: #{tpu_custom_call.1} parent=1 // pred_check
      _
    $region19: #{tpu_custom_call.1} parent=1 // pred_check_branch
      %41 = sbr.rel (0) target = $region21
    $region20: #{tpu_custom_call.1} parent=1 // pred_region
      %42 = dma.done [#allocation6], 256
    $region21: #{tpu_custom_call.1} parent=1 // pred_fallthru
      _
    %v43 = vld [vmem:[#allocation2] sm:$0xff]
    %v44 = vld [vmem:[#allocation2 + $0x8] sm:$0xff]
    %v45 = vld [vmem:[#allocation5] sm:$0xff]
    %v46 = vld [vmem:[#allocation5 + $0x8] sm:$0xff]
    %vm47 = vcmask 130048
    %v49 = vsel %vm47, %v43, 0
    %v52 = vsel %vm47, %v44, 0
    %54 = vmatprep.subr.mxu0 0.0
    %55 = vmatpush1.msra.mxu0 0.0
    %56 = vmatprep.subr.mxu0 0.0
    %57 = vmatpush1.msra.mxu0 0.0
    %58 = vmatprep.subr.mxu0 0.0
    %59 = vmatpush1.msra.mxu0 0.0
    %60 = vmatprep.subr.mxu0 0.0
    %61 = vmatpush1.msra.mxu0 0.0
    %62 = vmatprep.subr.mxu0 0.0
    %63 = vmatpush1.msra.mxu0 0.0
    %64 = vmatprep.subr.mxu0 0.0
    %65 = vmatpush1.msra.mxu0 0.0
    %66 = vmatprep.subr.mxu0 0.0
    %67 = vmatpush1.msra.mxu0 0.0
    %68 = vmatprep.subr.mxu0 0.0
    %69 = vmatpush1.msra.mxu0 0.0
    %70 = vmatprep.subr.mxu0 0.0
    %71 = vmatpush1.msra.mxu0 0.0
    %72 = vmatprep.subr.mxu0 0.0
    %73 = vmatpush1.msra.mxu0 0.0
    %74 = vmatprep.subr.mxu0 0.0
    %75 = vmatpush1.msra.mxu0 0.0
    %76 = vmatprep.subr.mxu0 0.0
    %77 = vmatpush1.msra.mxu0 0.0
    %78 = vmatprep.subr.mxu0 0.0
    %79 = vmatpush1.msra.mxu0 0.0
    %80 = vmatprep.subr.mxu0 0.0
    %81 = vmatpush1.msra.mxu0 0.0
    %82 = vmatprep.subr.mxu0 0.0
    %83 = vmatpush1.msra.mxu0 %v46
    %84 = vmatprep.subr.mxu0 0.0
    %85 = vmatpush1.msra.mxu0 %v45
    %86 = vmatprep.subr.mxu0 0.0
    %87 = vmatpush2.msra.mxu0 0.0
    %88 = vmatprep.subr.mxu0 0.0
    %89 = vmatpush2.msra.mxu0 0.0
    %90 = vmatprep.subr.mxu0 0.0
    %91 = vmatpush2.msra.mxu0 0.0
    %92 = vmatprep.subr.mxu0 0.0
    %93 = vmatpush2.msra.mxu0 0.0
    %94 = vmatprep.subr.mxu0 0.0
    %95 = vmatpush2.msra.mxu0 0.0
    %96 = vmatprep.subr.mxu0 0.0
    %97 = vmatpush2.msra.mxu0 0.0
    %98 = vmatprep.subr.mxu0 0.0
    %99 = vmatpush2.msra.mxu0 0.0
    %100 = vmatprep.subr.mxu0 0.0
    %101 = vmatpush2.msra.mxu0 0.0
    %102 = vmatprep.subr.mxu0 0.0
    %103 = vmatpush2.msra.mxu0 0.0
    %104 = vmatprep.subr.mxu0 0.0
    %105 = vmatpush2.msra.mxu0 0.0
    %106 = vmatprep.subr.mxu0 0.0
    %107 = vmatpush2.msra.mxu0 0.0
    %108 = vmatprep.subr.mxu0 0.0
    %109 = vmatpush2.msra.mxu0 0.0
    %110 = vmatprep.subr.mxu0 0.0
    %111 = vmatpush2.msra.mxu0 0.0
    %112 = vmatprep.subr.mxu0 0.0
    %113 = vmatpush2.msra.mxu0 0.0
    %114 = vmatprep.subr.mxu0 0.0
    %115 = vmatpush2.msra.mxu0 0.0
    %116 = vmatprep.subr.mxu0 0.0
    %117 = vmatpush2.msra.mxu0 0.0
    %118 = vmatprep.mubr.f32.mxu0 0.0
    %119 = vmatmul.mubr.f32.gmra.mxu0 %v49
    %v120 = vpop.f32.mrf.mxu0
    %v121 = vadd.f32 0.0, %v120
    %v122 = vpop.f32.mrf.mxu0
    %123 = vmatprep.mubr.f32.mxu0 0.0
    %124 = vmatmul.mubr.f32.gmra.mxu0 %v52
    %v125 = vpop.f32.mrf.mxu0
    %v126 = vadd.f32 0.0, %v125
    %v127 = vpop.f32.mrf.mxu0
    %128 = vdwg.mxu0
    %v129 = vld [vmem:[%s2] sm:$0x1]
    %v131 = vlaneseq
    %v132 = vshrl.u32 %v131, 7
    %v133 = vsub.s32 0, %v132
    %v134 = vrot.slane %v129, %v133
    %v136 = vsub.f32 %v121, %v134
    %v137 = vsub.f32 %v126, %v134
    %v138 = vmul.f32 %v136, %v136
    %v139 = vmul.f32 %v137, %v137
    %v140 = vadd.f32 %v136, %v137
    %v141 = vrot.slane %v140, 4
    %v142 = vadd.f32 %v140, %v141
    %v143 = vrot.slane %v142, 2
    %v144 = vadd.f32 %v142, %v143
    %v145 = vrot.slane %v144, 1
    %v146 = vadd.f32 %v144, %v145
    %v147 = vadd.f32 %v138, %v139
    %v148 = vrot.slane %v147, 4
    %v149 = vadd.f32 %v147, %v148
    %v150 = vrot.slane %v149, 2
    %v151 = vadd.f32 %v149, %v150
    %v152 = vrot.slane %v151, 1
    %v153 = vadd.f32 %v151, %v152
    %v154 = vmul.f32 %v146, %v146
    %v155 = vmul.f32 %v154, 0.0625
    %v156 = vsub.f32 %v153, %v155
    %v157 = vmul.f32 %v156, 0.06666667
    %v158 = vmax.f32 %v157, 0.0
    %v159 = vmul.f32 %v158, 0.25
    %v160 = vadd.f32 %v138, %v159
    %v161 = vadd.f32 %v139, %v159
    %vm162 = vcmp.gt.f32.partialorder %v160, 0.0
    %vm163 = vcmp.gt.f32.partialorder %v161, 0.0
    %v164 = vsel %vm162, %v160, 1.0
    %v165 = vsel %vm163, %v161, 1.0
    %v166 = vrcp.pop %v164
    %v167 = vmul.f32 %v138, %v166
    %v168 = vrcp.pop %v165
    %v169 = vmul.f32 %v139, %v168
    %170 = vst [vmem:[#allocation7] sm:$0xff] %v167
    %171 = vst [vmem:[#allocation7 + $0x8] sm:$0xff] %v169
    // Predicated region
    $region22: #{tpu_custom_call.1} parent=1 // pred_check
      _
    $region23: #{tpu_custom_call.1} parent=1 // pred_check_branch
      %173 = sbr.rel (0) target = $region25
    $region24: #{tpu_custom_call.1} parent=1 // pred_region
      %s175 = ssub.s32 256, 256
      %176 = vsyncadd [#allocation4], %s175
      %s177 = sshll.u32 [#allocation7], 4
      %s178 = int_to_ptr.vmem [resolvable:$true] %s177
      %183 = dma.vmem_to_hbm [thread:$0]  %s178, 256, %s3, [#allocation4], 128, 128, 8
    $region25: #{tpu_custom_call.1} parent=1 // pred_fallthru
      _
    // Predicated region
    $region26: #{tpu_custom_call.1} parent=1 // pred_check
      _
    $region27: #{tpu_custom_call.1} parent=1 // pred_check_branch
      %185 = sbr.rel (0) target = $region29
    $region28: #{tpu_custom_call.1} parent=1 // pred_region
      %186 = dma.done [#allocation4], 256
    $region29: #{tpu_custom_call.1} parent=1 // pred_fallthru
      _
    %187 = vsyncpa [#allocation3], 1
    %188 = vsyncpa [#allocation6], 1
    %189 = vsyncpa [#allocation4], 1

</llo_original>
